<compile_context>
chip_gen: v5e
topology: v5e:2x2
jax: 0.10.0
libtpu: 0.0.40
codegen_flags: <defaults>
</compile_context>

<pallas_src>
import math
from functools import partial

import jax
import jax.numpy as jnp
from jax import lax
from jax.experimental import pallas as pl
from jax.experimental.pallas import tpu as pltpu


def _round_up(x, m):
    return ((x + m - 1) // m) * m


def _equal_conv2d_kernel(x_ref, w_ref, b_ref, o_ref, *, ksize, scale):
    """One (batch, row-tile) grid step.

    x_ref : (Th + K - 1, Wp, Cin)   haloed input row tile (VMEM)
    w_ref : (K*K*Cin, CoutP)        im2col weight matrix, unscaled (VMEM, resident)
    b_ref : (1, CoutP)              bias (VMEM, resident)
    o_ref : (Th, Wo, CoutP)         output row tile (VMEM)
    """
    th, wo, _ = o_ref.shape

    # im2col: gather the K*K shifted views (channel-minor) and fuse them into a
    # single MXU matmul with contraction depth K*K*Cin instead of Cin per tap.
    taps = []
    for kh in range(ksize):
        for kw in range(ksize):
            taps.append(x_ref[pl.ds(kh, th), pl.ds(kw, wo), :])
    patch = taps[0] if len(taps) == 1 else jnp.concatenate(taps, axis=-1)

    # Native-dtype MXU feeds; f32 accumulator only.
    acc = jnp.einsum(
        "hwi,io->hwo", patch, w_ref[...], preferred_element_type=jnp.float32
    )

    # Epilogue (f32 VPU): equalized-LR scale folded into one FMA with the bias.
    acc = acc * jnp.float32(scale) + b_ref[...].astype(jnp.float32)
    o_ref[...] = acc.astype(o_ref.dtype)


def equal_conv2d(x, weight, bias=None, *, stride=1, padding=0, tile_h=8):
    """StyleGAN2 equalized conv2d forward.

    x:      [N, Cin, H, W]   (NCHW, PyTorch layout)
    weight: [Cout, Cin, K, K] (OIHW, unscaled)
    bias:   [Cout] or None
    """
    if stride != 1:
        # TODO(synk): stride>1 path (phase-split W so loads stay contiguous); the
        # generator's non-resampled convs are all stride=1.
        raise NotImplementedError("equal_conv2d Pallas kernel supports stride=1 only")

    n, cin, h, w = x.shape
    cout, _, ksize, _ = weight.shape
    scale = 1.0 / math.sqrt(cin * ksize * ksize)
    ho = h + 2 * padding - ksize + 1
    wo = w + 2 * padding - ksize + 1
    hp, wp = h + 2 * padding, w + 2 * padding
    del hp  # (only wp is needed below)

    # Lane-dense output: pad Cout to a multiple of 128 so stores are unmasked vst.
    cout_p = _round_up(cout, 128)

    # Row tiling with a (K-1) halo; keep tiles that evenly divide Ho.
    th = tile_h if (ho % tile_h == 0 and ho > tile_h) else ho
    nh = ho // th
    th_in = th + ksize - 1

    # ---- wrapper-side glue (plain JAX): layout conversion + halo tiling ------
    # TODO(synk): at production sizes, replace this materialized haloed-tile copy
    # with in-kernel halo DMA (memory_space=pl.ANY + pltpu.make_async_copy) so the
    # activation is read from HBM only once.
    x_nhwc = jnp.transpose(x, (0, 2, 3, 1))
    x_pad = jnp.pad(
        x_nhwc, ((0, 0), (padding, padding), (padding, padding), (0, 0))
    )
    x_tiles = jnp.stack(
        [x_pad[:, i * th : i * th + th_in, :, :] for i in range(nh)], axis=1
    )  # (N, nh, Th+K-1, Wp, Cin)

    w_mat = jnp.transpose(weight, (2, 3, 1, 0)).reshape(ksize * ksize * cin, cout)
    if cout_p != cout:
        w_mat = jnp.pad(w_mat, ((0, 0), (0, cout_p - cout)))
    b_vec = bias if bias is not None else jnp.zeros((cout,), x.dtype)
    if cout_p != cout:
        b_vec = jnp.pad(b_vec, (0, cout_p - cout))
    b2d = b_vec.reshape(1, cout_p).astype(x.dtype)

    out_padded = pl.pallas_call(
        partial(_equal_conv2d_kernel, ksize=ksize, scale=scale),
        out_shape=jax.ShapeDtypeStruct((n, ho, wo, cout_p), x.dtype),
        grid_spec=pltpu.PrefetchScalarGridSpec(
            num_scalar_prefetch=0,
            grid=(n, nh),
            in_specs=[
                pl.BlockSpec(
                    (None, None, th_in, wp, cin), lambda b_, i: (b_, i, 0, 0, 0)
                ),
                pl.BlockSpec((ksize * ksize * cin, cout_p), lambda b_, i: (0, 0)),
                pl.BlockSpec((1, cout_p), lambda b_, i: (0, 0)),
            ],
            out_specs=pl.BlockSpec(
                (None, th, wo, cout_p), lambda b_, i: (b_, i, 0, 0)
            ),
        ),
        compiler_params=pltpu.CompilerParams(
            dimension_semantics=("parallel", "parallel"),
            vmem_limit_bytes=32 * 1024 * 1024,
        ),
    )(x_tiles, w_mat, b2d)

    out = out_padded[..., :cout]
    return jnp.transpose(out, (0, 3, 1, 2))  # back to NCHW


if __name__ == "__main__":
    key = jax.random.PRNGKey(0)
    k1, k2, k3, k4 = jax.random.split(key, 4)

    # Main 3x3 style-conv-like layer: 128 -> 128 channels, 16x16, stride 1, pad 1.
    n, cin, cout, hw, ksz, pad = 2, 128, 128, 16, 3, 1
    x = jax.random.normal(k1, (n, cin, hw, hw), dtype=jnp.float32)
    w = jax.random.normal(k2, (cout, cin, ksz, ksz), dtype=jnp.float32)
    b = 0.1 * jax.random.normal(k3, (cout,), dtype=jnp.float32)

    out = equal_conv2d(x, w, b, stride=1, padding=pad)
    out = jax.block_until_ready(out)

    scale = 1.0 / math.sqrt(cin * ksz * ksz)
    ref = lax.conv_general_dilated(
        x, w * scale, (1, 1), [(pad, pad), (pad, pad)],
        dimension_numbers=("NCHW", "OIHW", "NCHW"),
        precision=lax.Precision.HIGHEST,
    ) + b[None, :, None, None]
    assert out.shape == ref.shape
    err = float(jnp.max(jnp.abs(out - ref)))
    assert err < 5e-3, f"3x3 conv mismatch: max abs err = {err}"

    # ToRGB-like 1x1 layer: 128 -> 3 channels (exercises the Cout -> 128 lane padding).
    cout2, ksz2, pad2 = 3, 1, 0
    w2 = jax.random.normal(k4, (cout2, cin, ksz2, ksz2), dtype=jnp.float32)
    b2 = jnp.zeros((cout2,), dtype=jnp.float32)

    out2 = equal_conv2d(x, w2, b2, stride=1, padding=pad2)
    out2 = jax.block_until_ready(out2)

    scale2 = 1.0 / math.sqrt(cin * ksz2 * ksz2)
    ref2 = lax.conv_general_dilated(
        x, w2 * scale2, (1, 1), [(pad2, pad2), (pad2, pad2)],
        dimension_numbers=("NCHW", "OIHW", "NCHW"),
        precision=lax.Precision.HIGHEST,
    ) + b2[None, :, None, None]
    assert out2.shape == ref2.shape
    err2 = float(jnp.max(jnp.abs(out2 - ref2)))
    assert err2 < 5e-3, f"1x1 ToRGB conv mismatch: max abs err = {err2}"

    print("KERNEL_OK")
</pallas_src>

<mosaic_0001>
module attributes {stable_mosaic.version = 11 : i64} {
  func.func @_equal_conv2d_kernel(%arg0: i32, %arg1: i32, %arg2: memref<1x1x10x18x128xf32, #tpu.memory_space<vmem>>, %arg3: memref<1152x128xf32, #tpu.memory_space<vmem>>, %arg4: memref<1x128xf32, #tpu.memory_space<vmem>>, %arg5: memref<1x8x16x128xf32, #tpu.memory_space<vmem>>) attributes {dimension_semantics = [#tpu.dimension_semantics<parallel>, #tpu.dimension_semantics<parallel>], iteration_bounds = array<i64: 2, 2>, scalar_prefetch = 0 : i64, scratch_operands = 0 : i64, tpu.core_type = #tpu.core_type<tc>, window_params = [{transform_indices = @transform_0, window_bounds = array<i64: 1, 1, 10, 18, 128>}, {pipeline_mode = #tpu.pipeline_mode<synchronous>, transform_indices = @transform_1, window_bounds = array<i64: 1152, 128>}, {pipeline_mode = #tpu.pipeline_mode<synchronous>, transform_indices = @transform_2, window_bounds = array<i64: 1, 128>}, {transform_indices = @transform_3, window_bounds = array<i64: 1, 8, 16, 128>}]} {
    %c0 = arith.constant 0 : index
    %c0_0 = arith.constant 0 : index
    %c0_1 = arith.constant 0 : index
    %c0_2 = arith.constant 0 : index
    %c0_3 = arith.constant 0 : index
    %0 = vector.load %arg2[%c0, %c0_0, %c0_1, %c0_2, %c0_3] : memref<1x1x10x18x128xf32, #tpu.memory_space<vmem>>, vector<1x1x8x16x128xf32>
    %1 = vector.shape_cast %0 : vector<1x1x8x16x128xf32> to vector<8x16x128xf32>
    %c0_4 = arith.constant 0 : index
    %c0_5 = arith.constant 0 : index
    %c0_6 = arith.constant 0 : index
    %c1 = arith.constant 1 : index
    %c0_7 = arith.constant 0 : index
    %2 = vector.load %arg2[%c0_4, %c0_5, %c0_6, %c1, %c0_7] : memref<1x1x10x18x128xf32, #tpu.memory_space<vmem>>, vector<1x1x8x16x128xf32>
    %3 = vector.shape_cast %2 : vector<1x1x8x16x128xf32> to vector<8x16x128xf32>
    %c0_8 = arith.constant 0 : index
    %c0_9 = arith.constant 0 : index
    %c0_10 = arith.constant 0 : index
    %c2 = arith.constant 2 : index
    %c0_11 = arith.constant 0 : index
    %4 = vector.load %arg2[%c0_8, %c0_9, %c0_10, %c2, %c0_11] : memref<1x1x10x18x128xf32, #tpu.memory_space<vmem>>, vector<1x1x8x16x128xf32>
    %5 = vector.shape_cast %4 : vector<1x1x8x16x128xf32> to vector<8x16x128xf32>
    %c0_12 = arith.constant 0 : index
    %c0_13 = arith.constant 0 : index
    %c1_14 = arith.constant 1 : index
    %c0_15 = arith.constant 0 : index
    %c0_16 = arith.constant 0 : index
    %6 = vector.load %arg2[%c0_12, %c0_13, %c1_14, %c0_15, %c0_16] : memref<1x1x10x18x128xf32, #tpu.memory_space<vmem>>, vector<1x1x8x16x128xf32>
    %7 = vector.shape_cast %6 : vector<1x1x8x16x128xf32> to vector<8x16x128xf32>
    %c0_17 = arith.constant 0 : index
    %c0_18 = arith.constant 0 : index
    %c1_19 = arith.constant 1 : index
    %c1_20 = arith.constant 1 : index
    %c0_21 = arith.constant 0 : index
    %8 = vector.load %arg2[%c0_17, %c0_18, %c1_19, %c1_20, %c0_21] : memref<1x1x10x18x128xf32, #tpu.memory_space<vmem>>, vector<1x1x8x16x128xf32>
    %9 = vector.shape_cast %8 : vector<1x1x8x16x128xf32> to vector<8x16x128xf32>
    %c0_22 = arith.constant 0 : index
    %c0_23 = arith.constant 0 : index
    %c1_24 = arith.constant 1 : index
    %c2_25 = arith.constant 2 : index
    %c0_26 = arith.constant 0 : index
    %10 = vector.load %arg2[%c0_22, %c0_23, %c1_24, %c2_25, %c0_26] : memref<1x1x10x18x128xf32, #tpu.memory_space<vmem>>, vector<1x1x8x16x128xf32>
    %11 = vector.shape_cast %10 : vector<1x1x8x16x128xf32> to vector<8x16x128xf32>
    %c0_27 = arith.constant 0 : index
    %c0_28 = arith.constant 0 : index
    %c2_29 = arith.constant 2 : index
    %c0_30 = arith.constant 0 : index
    %c0_31 = arith.constant 0 : index
    %12 = vector.load %arg2[%c0_27, %c0_28, %c2_29, %c0_30, %c0_31] : memref<1x1x10x18x128xf32, #tpu.memory_space<vmem>>, vector<1x1x8x16x128xf32>
    %13 = vector.shape_cast %12 : vector<1x1x8x16x128xf32> to vector<8x16x128xf32>
    %c0_32 = arith.constant 0 : index
    %c0_33 = arith.constant 0 : index
    %c2_34 = arith.constant 2 : index
    %c1_35 = arith.constant 1 : index
    %c0_36 = arith.constant 0 : index
    %14 = vector.load %arg2[%c0_32, %c0_33, %c2_34, %c1_35, %c0_36] : memref<1x1x10x18x128xf32, #tpu.memory_space<vmem>>, vector<1x1x8x16x128xf32>
    %15 = vector.shape_cast %14 : vector<1x1x8x16x128xf32> to vector<8x16x128xf32>
    %c0_37 = arith.constant 0 : index
    %c0_38 = arith.constant 0 : index
    %c2_39 = arith.constant 2 : index
    %c2_40 = arith.constant 2 : index
    %c0_41 = arith.constant 0 : index
    %16 = vector.load %arg2[%c0_37, %c0_38, %c2_39, %c2_40, %c0_41] : memref<1x1x10x18x128xf32, #tpu.memory_space<vmem>>, vector<1x1x8x16x128xf32>
    %17 = vector.shape_cast %16 : vector<1x1x8x16x128xf32> to vector<8x16x128xf32>
    %18 = tpu.concatenate %1, %3, %5, %7, %9, %11, %13, %15, %17 in 2 : vector<8x16x128xf32>, vector<8x16x128xf32>, vector<8x16x128xf32>, vector<8x16x128xf32>, vector<8x16x128xf32>, vector<8x16x128xf32>, vector<8x16x128xf32>, vector<8x16x128xf32>, vector<8x16x128xf32> -> vector<8x16x1152xf32>
    %c0_42 = arith.constant 0 : index
    %c0_43 = arith.constant 0 : index
    %19 = vector.load %arg3[%c0_42, %c0_43] : memref<1152x128xf32, #tpu.memory_space<vmem>>, vector<1152x128xf32>
    "tpu.trace_start"() <{level = 10 : i32, message = "hwi,io->hwo"}> : () -> ()
    %cst = arith.constant dense<0.000000e+00> : vector<8x16x128xf32>
    %20 = tpu.matmul %18, %19, %cst {dimension_numbers = #tpu.dot_dimension_numbers<[2], [0], [0, 1], [1], [0, 0, 0, 1, 1, 1], [], []>} : vector<8x16x1152xf32>, vector<1152x128xf32>, vector<8x16x128xf32> -> vector<8x16x128xf32>
    "tpu.trace_stop"() : () -> ()
    %cst_44 = arith.constant 0.0294627827 : f32
    %21 = vector.broadcast %cst_44 : f32 to vector<8x16x128xf32>
    %22 = arith.mulf %20, %21 : vector<8x16x128xf32>
    %c0_45 = arith.constant 0 : index
    %c0_46 = arith.constant 0 : index
    %23 = vector.load %arg4[%c0_45, %c0_46] : memref<1x128xf32, #tpu.memory_space<vmem>>, vector<1x128xf32>
    %24 = vector.shape_cast %23 : vector<1x128xf32> to vector<1x1x128xf32>
    %25 = vector.broadcast %24 : vector<1x1x128xf32> to vector<8x16x128xf32>
    %26 = arith.addf %22, %25 : vector<8x16x128xf32>
    %c0_47 = arith.constant 0 : index
    %c0_48 = arith.constant 0 : index
    %c0_49 = arith.constant 0 : index
    %c0_50 = arith.constant 0 : index
    %27 = vector.load %arg5[%c0_47, %c0_48, %c0_49, %c0_50] : memref<1x8x16x128xf32, #tpu.memory_space<vmem>>, vector<1x8x16x128xf32>
    %28 = vector.shape_cast %27 : vector<1x8x16x128xf32> to vector<8x16x128xf32>
    %29 = vector.shape_cast %26 : vector<8x16x128xf32> to vector<1x8x16x128xf32>
    tpu.vector_store %arg5[%c0_47, %c0_48, %c0_49, %c0_50], %29 {strides = array<i32>} : memref<1x8x16x128xf32, #tpu.memory_space<vmem>>, vector<1x8x16x128xf32>,
    return
  }
  func.func @transform_0(%arg0: i32, %arg1: i32) -> (i32, i32, i32, i32, i32) {
    %c0_i32 = arith.constant 0 : i32
    %c0_i32_0 = arith.constant 0 : i32
    %c0_i32_1 = arith.constant 0 : i32
    %c0_i32_2 = arith.constant 0 : i32
    return %arg0, %arg1, %c0_i32, %c0_i32_0, %c0_i32_1 : i32, i32, i32, i32, i32
  }
  func.func @transform_1(%arg0: i32, %arg1: i32) -> (i32, i32) {
    %c0_i32 = arith.constant 0 : i32
    %c0_i32_0 = arith.constant 0 : i32
    %c0_i32_1 = arith.constant 0 : i32
    return %c0_i32, %c0_i32_0 : i32, i32
  }
  func.func @transform_2(%arg0: i32, %arg1: i32) -> (i32, i32) {
    %c0_i32 = arith.constant 0 : i32
    %c0_i32_0 = arith.constant 0 : i32
    %c0_i32_1 = arith.constant 0 : i32
    return %c0_i32, %c0_i32_0 : i32, i32
  }
  func.func @transform_3(%arg0: i32, %arg1: i32) -> (i32, i32, i32, i32) {
    %c0_i32 = arith.constant 0 : i32
    %c0_i32_0 = arith.constant 0 : i32
    %c0_i32_1 = arith.constant 0 : i32
    return %arg0, %arg1, %c0_i32, %c0_i32_0 : i32, i32, i32, i32
  }
}

</mosaic_0001>

<llo_original>
// kernel: tpu_custom_call.1
$region0: #{tpu_custom_call.1}
  #allocation0 [shape = 'u32[]', space=smem, size = 0x4, offset = 0x4, fixed_abs, tag = 'smem constant byte address 0x4 - core index']
  #allocation1 [shape = 'u32[72,128]{1,0:T(1,128)}', space=vmem, size = 0x9000, scoped, tag = 'internal scratch']
  %s0 = inlined_call_operand.vmem [shape: f32[2,2,10,18,128], index: 0, kind: input, shape index: {}]
  %s1 = inlined_call_operand.vmem [shape: f32[1152,128], index: 1, kind: input, shape index: {}]
  %s2 = inlined_call_operand.vmem [shape: f32[1,128], index: 2, kind: input, shape index: {}]
  %s3 = inlined_call_operand.hbm [shape: f32[2,16,16,128], index: 3, kind: output, shape index: {}]
  %s4 = sld [smem:[#allocation0]]
  $region45: #{tpu_custom_call.1} parent=0
    _
  %s6 = ssub.s32 1, %s4
  %s7 = scalar_select 0, %s6, %s4
  $region1: #{tpu_custom_call.1} parent=0
    #allocation2 [shape = 'u8[131072]{0}', space=vmem, size = 0x20000, scoped, tag = 'output window, operand 0']
    #allocation3 [shape = 's32[2]{0}', space=sflag, size = 0x8, scoped, tag = 'scoped memory for tpu_custom_call.1']
    %8 = vsyncpa [#allocation3], 0
    %s9 = scalar_lea.sflag [#allocation3], 1
    %10 = vsyncpa %s9, 0
    loop: start=0, step=1, limit=6
    $region2: #{tpu_custom_call.1} parent=1 // loop_pre_header
      _
    $region3: #{tpu_custom_call.1} parent=1 // loop_header
      %s12 = sphi 0, %s16
      %p13 = scmp.ge.s32.totalorder %s12, 6
      %s19 = sphi 0, %s31
      %s20 = sphi 0, %s27
      %s21 = sphi 0, %s19
      %s22 = sphi 0, %s20
      %s23 = sphi 0, %s21
      %s24 = sphi 0, %s22
      %s36 = sphi 0, %s38
      %s39 = sphi 0, %s36
      %s40 = sphi 0, %s39
      %s56 = sphi 0, %s40
      %s60 = sphi 0, %s60
      %s62 = sphi 0, %s60
      %s63 = sphi 0, %s62
      %s77 = sphi 0, %s63
      %s81 = sphi 0, %s81
      %s83 = sphi 0, %s81
      %s84 = sphi 0, %s83
      %s98 = sphi 0, %s84
      %s106 = sphi 0, %s108
      %s109 = sphi 0, %s106
      %s110 = sphi 0, %s109
      %s126 = sphi 0, %s110
    $region4: #{tpu_custom_call.1} parent=1 // loop_header_branch
      %15 = sbr.rel (%p13) target = $region8
    $region5: #{tpu_custom_call.1} parent=1 // loop_body
      %s17 = ssub.s32 %s12, 1
      %s18 = ssub.s32 %s12, 2
      %s25 = sadd.s32 1, %s20
      %p26 = scmp.ge.s32.totalorder %s25, 2
      %s27 = scalar_select %p26, 0, %s25
      %s28 = sadd.s32 1, %s19
      %s29 = scalar_select %p26, %s28, %s19
      %p30 = scmp.ge.s32.totalorder %s29, 2
      %s31 = scalar_select %p30, 0, %s29
      %s32 = ssub.s32 %s19, %s31
      %s33 = ssub.s32 %s20, %s27
      %s34 = sor.u32 %s32, %s33
      %p35 = scmp.eq.s32.totalorder %s34, 0
      %s37 = sadd.s32 %s36, 1
      %s38 = scalar_select %p35, %s36, %s37
      %p41 = pneg %p35
      %p42 = scmp.eq.s32.totalorder %s12, 3
      %p43 = por %p41, %p42
      %p44 = scmp.ne.s32.totalorder %s36, %s39
      %p45 = scmp.eq.s32.totalorder %s12, 0
      %p46 = por %p44, %p45
      %p47 = scmp.ne.s32.totalorder %s36, %s39
      %p48 = scmp.eq.s32.totalorder %s17, 3
      %p49 = por %p47, %p48
      %p50 = scmp.ne.s32.totalorder %s39, %s40
      %p51 = scmp.eq.s32.totalorder %s17, 0
      %p52 = por %p50, %p51
      %p53 = scmp.ne.s32.totalorder %s39, %s40
      %p54 = scmp.eq.s32.totalorder %s18, 3
      %p55 = por %p53, %p54
      %p57 = scmp.ne.s32.totalorder %s40, %s56
      %p58 = scmp.eq.s32.totalorder %s18, 0
      %p59 = por %p57, %p58
      %s61 = sadd.s32 %s60, 1
      %p64 = scmp.eq.s32.totalorder %s12, 3
      %p65 = scmp.ne.s32.totalorder %s60, %s62
      %p66 = scmp.eq.s32.totalorder %s12, 0
      %p67 = por %p65, %p66
      %p68 = scmp.ne.s32.totalorder %s60, %s62
      %p69 = scmp.eq.s32.totalorder %s17, 3
      %p70 = por %p68, %p69
      %p71 = scmp.ne.s32.totalorder %s62, %s63
      %p72 = scmp.eq.s32.totalorder %s17, 0
      %p73 = por %p71, %p72
      %p74 = scmp.ne.s32.totalorder %s62, %s63
      %p75 = scmp.eq.s32.totalorder %s18, 3
      %p76 = por %p74, %p75
      %p78 = scmp.ne.s32.totalorder %s63, %s77
      %p79 = scmp.eq.s32.totalorder %s18, 0
      %p80 = por %p78, %p79
      %s82 = sadd.s32 %s81, 1
      %p85 = scmp.eq.s32.totalorder %s12, 3
      %p86 = scmp.ne.s32.totalorder %s81, %s83
      %p87 = scmp.eq.s32.totalorder %s12, 0
      %p88 = por %p86, %p87
      %p89 = scmp.ne.s32.totalorder %s81, %s83
      %p90 = scmp.eq.s32.totalorder %s17, 3
      %p91 = por %p89, %p90
      %p92 = scmp.ne.s32.totalorder %s83, %s84
      %p93 = scmp.eq.s32.totalorder %s17, 0
      %p94 = por %p92, %p93
      %p95 = scmp.ne.s32.totalorder %s83, %s84
      %p96 = scmp.eq.s32.totalorder %s18, 3
      %p97 = por %p95, %p96
      %p99 = scmp.ne.s32.totalorder %s84, %s98
      %p100 = scmp.eq.s32.totalorder %s18, 0
      %p101 = por %p99, %p100
      %s102 = ssub.s32 %s19, %s31
      %s103 = ssub.s32 %s20, %s27
      %s104 = sor.u32 %s102, %s103
      %p105 = scmp.eq.s32.totalorder %s104, 0
      %s107 = sadd.s32 %s106, 1
      %s108 = scalar_select %p105, %s106, %s107
      %p111 = pneg %p105
      %p112 = scmp.eq.s32.totalorder %s12, 3
      %p113 = por %p111, %p112
      %p114 = scmp.ne.s32.totalorder %s106, %s109
      %p115 = scmp.eq.s32.totalorder %s12, 0
      %p116 = por %p114, %p115
      %p117 = scmp.ne.s32.totalorder %s106, %s109
      %p118 = scmp.eq.s32.totalorder %s17, 3
      %p119 = por %p117, %p118
      %p120 = scmp.ne.s32.totalorder %s109, %s110
      %p121 = scmp.eq.s32.totalorder %s17, 0
      %p122 = por %p120, %p121
      %p123 = scmp.ne.s32.totalorder %s109, %s110
      %p124 = scmp.eq.s32.totalorder %s18, 3
      %p125 = por %p123, %p124
      %p127 = scmp.ne.s32.totalorder %s110, %s126
      %p128 = scmp.eq.s32.totalorder %s18, 0
      %p129 = por %p127, %p128
      %p130 = scmp.le.s32.totalorder 1, %s12
      %p131 = scmp.lt.s32.totalorder %s12, 5
      %p132 = pnand %p130, %p131
      %p133 = pneg %p132
      // Predicated region
      $region9: #{tpu_custom_call.1} parent=5 // pred_check
        _
      $region10: #{tpu_custom_call.1} parent=5 // pred_check_branch
        %135 = sbr.rel (%p132) target = $region12
      $region11: #{tpu_custom_call.1} parent=5 // pred_region
        %s136 = ssub.s32 %s12, 1
        // Predicated region
        $region13: #{tpu_custom_call.1} parent=11 // pred_check
          %p137 = pneg %p73
        $region14: #{tpu_custom_call.1} parent=11 // pred_check_branch
          %139 = sbr.rel (%p137) target = $region16
        $region15: #{tpu_custom_call.1} parent=11 // pred_region
          _
        $region16: #{tpu_custom_call.1} parent=11 // pred_fallthru
          _
        // Predicated region
        $region17: #{tpu_custom_call.1} parent=11 // pred_check
          %p140 = pneg %p94
        $region18: #{tpu_custom_call.1} parent=11 // pred_check_branch
          %142 = sbr.rel (%p140) target = $region20
        $region19: #{tpu_custom_call.1} parent=11 // pred_region
          _
        $region20: #{tpu_custom_call.1} parent=11 // pred_fallthru
          _
      $region12: #{tpu_custom_call.1} parent=5 // pred_fallthru
        _
      %p143 = scmp.lt.s32.totalorder %s12, 4
      // Predicated region
      $region21: #{tpu_custom_call.1} parent=5 // pred_check
        %p144 = pneg %p143
      $region22: #{tpu_custom_call.1} parent=5 // pred_check_branch
        %146 = sbr.rel (%p144) target = $region24
      $region23: #{tpu_custom_call.1} parent=5 // pred_region
        // Predicated region
        $region25: #{tpu_custom_call.1} parent=23 // pred_check
          %p147 = pneg %p46
        $region26: #{tpu_custom_call.1} parent=23 // pred_check_branch
          %149 = sbr.rel (%p147) target = $region28
        $region27: #{tpu_custom_call.1} parent=23 // pred_region
          %p150 = scmp.lt.s32.totalorder %s19, 1
          %s151 = scalar_select %p150, %s19, 1
          %p152 = scmp.lt.s32.totalorder %s20, 1
          %s153 = scalar_select %p152, %s20, 1
          %s154 = smul.addr %s153, 30
          %s155 = smul.addr %s151, 60
          %s156 = sadd.s32 %s154, %s155
          %s157 = smul.addr %s156, 8
          %s158 = scalar_lea.vmem %s0, %s157
        $region28: #{tpu_custom_call.1} parent=23 // pred_fallthru
          _
      $region24: #{tpu_custom_call.1} parent=5 // pred_fallthru
        _
      %p159 = scmp.le.s32.totalorder 1, %s12
      %p160 = scmp.lt.s32.totalorder %s12, 5
      %p161 = pnand %p159, %p160
      %p162 = pneg %p161
      // Predicated region
      $region29: #{tpu_custom_call.1} parent=5 // pred_check
        _
      $region30: #{tpu_custom_call.1} parent=5 // pred_check_branch
        %164 = sbr.rel (%p161) target = $region32
      $region31: #{tpu_custom_call.1} parent=5 // pred_region
        %s165 = ssub.s32 %s12, 1
        %p166 = scmp.lt.s32.totalorder %s21, 1
        %s167 = scalar_select %p166, %s21, 1
        %p168 = scmp.lt.s32.totalorder %s22, 1
        %s169 = scalar_select %p168, %s22, 1
        %s170 = smul.addr %s169, 30
        %s171 = smul.addr %s167, 60
        %s172 = sadd.s32 %s170, %s171
        %s173 = smul.addr %s172, 8
        %s174 = scalar_lea.vmem %s0, %s173
        %p175 = pneg %p52
        %p176 = pneg %p49
        %p177 = pneg %p73
        %p178 = pneg %p70
        %p179 = pneg %p94
        %p180 = pneg %p91
        %p181 = pneg %p122
        %p182 = pneg %p119
        %s183 = sand.u32 %s109, 1
        %s184 = scalar_lea.sflag [#allocation3], %s183
        %s185 = sand.u32 %s109, 1
        %s186 = smul.addr %s185, 128
        %s187 = scalar_lea.vmem [#allocation2], %s186
        %p188 = scmp.lt.s32.totalorder %s21, 1
        %s189 = scalar_select %p188, %s21, 1
        %p190 = scmp.lt.s32.totalorder %s22, 1
        %s191 = scalar_select %p190, %s22, 1
        %s192 = smul.addr %s191, 30
        %s193 = smul.addr %s189, 60
        %s194 = sadd.s32 %s192, %s193
        %s195 = smul.addr %s194, 8
        %s196 = scalar_lea.vmem %s0, %s195
        %s197 = smul.u32 8, %s22
        %v198 = vld [vmem:[%s196] sm:$0xff]
        %v199 = vld [vmem:[%s196 + $0x8] sm:$0xff]
        %v200 = vld [vmem:[%s196 + $0x18] sm:$0xff]
        %v201 = vld [vmem:[%s196 + $0x20] sm:$0xff]
        %v202 = vld [vmem:[%s196 + $0x30] sm:$0xff]
        %v203 = vld [vmem:[%s196 + $0x38] sm:$0xff]
        %v204 = vld [vmem:[%s196 + $0x48] sm:$0xff]
        %v205 = vld [vmem:[%s196 + $0x50] sm:$0xff]
        %v206 = vld [vmem:[%s196 + $0x60] sm:$0xff]
        %v207 = vld [vmem:[%s196 + $0x68] sm:$0xff]
        %v208 = vld [vmem:[%s196 + $0x78] sm:$0xff]
        %v209 = vld [vmem:[%s196 + $0x80] sm:$0xff]
        %v210 = vld [vmem:[%s196 + $0x90] sm:$0xff]
        %v211 = vld [vmem:[%s196 + $0x98] sm:$0xff]
        %v212 = vld [vmem:[%s196 + $0xa8] sm:$0xff]
        %v213 = vld [vmem:[%s196 + $0xb0] sm:$0xff]
        %v214 = vld [vmem:[%s196 + $0x1] sm:$0xff]
        %v215 = vld [vmem:[%s196 + $0x9] sm:$0xff]
        %v216 = vld [vmem:[%s196 + $0x19] sm:$0xff]
        %v217 = vld [vmem:[%s196 + $0x21] sm:$0xff]
        %v218 = vld [vmem:[%s196 + $0x31] sm:$0xff]
        %v219 = vld [vmem:[%s196 + $0x39] sm:$0xff]
        %v220 = vld [vmem:[%s196 + $0x49] sm:$0xff]
        %v221 = vld [vmem:[%s196 + $0x51] sm:$0xff]
        %v222 = vld [vmem:[%s196 + $0x61] sm:$0xff]
        %v223 = vld [vmem:[%s196 + $0x69] sm:$0xff]
        %v224 = vld [vmem:[%s196 + $0x79] sm:$0xff]
        %v225 = vld [vmem:[%s196 + $0x81] sm:$0xff]
        %v226 = vld [vmem:[%s196 + $0x91] sm:$0xff]
        %v227 = vld [vmem:[%s196 + $0x99] sm:$0xff]
        %v228 = vld [vmem:[%s196 + $0xa9] sm:$0xff]
        %v229 = vld [vmem:[%s196 + $0xb1] sm:$0xff]
        %v230 = vld [vmem:[%s196 + $0x2] sm:$0xff]
        %v231 = vld [vmem:[%s196 + $0xa] sm:$0xff]
        %v232 = vld [vmem:[%s196 + $0x1a] sm:$0xff]
        %v233 = vld [vmem:[%s196 + $0x22] sm:$0xff]
        %v234 = vld [vmem:[%s196 + $0x32] sm:$0xff]
        %v235 = vld [vmem:[%s196 + $0x3a] sm:$0xff]
        %v236 = vld [vmem:[%s196 + $0x4a] sm:$0xff]
        %v237 = vld [vmem:[%s196 + $0x52] sm:$0xff]
        %v238 = vld [vmem:[%s196 + $0x62] sm:$0xff]
        %v239 = vld [vmem:[%s196 + $0x6a] sm:$0xff]
        %v240 = vld [vmem:[%s196 + $0x7a] sm:$0xff]
        %v241 = vld [vmem:[%s196 + $0x82] sm:$0xff]
        %v242 = vld [vmem:[%s196 + $0x92] sm:$0xff]
        %v243 = vld [vmem:[%s196 + $0x9a] sm:$0xff]
        %v244 = vld [vmem:[%s196 + $0xaa] sm:$0xff]
        %v245 = vld [vmem:[%s196 + $0xb2] sm:$0xff]
        %s246 = scalar_lea.vmem %s196, 24
        %v247 = vld [vmem:[%s246] sm:$0xff]
        %v248 = vld [vmem:[%s246 + $0x8] sm:$0xff]
        %v249 = vld [vmem:[%s246 + $0x18] sm:$0xff]
        %v250 = vld [vmem:[%s246 + $0x20] sm:$0xff]
        %v251 = vld [vmem:[%s246 + $0x30] sm:$0xff]
        %v252 = vld [vmem:[%s246 + $0x38] sm:$0xff]
        %v253 = vld [vmem:[%s246 + $0x48] sm:$0xff]
        %v254 = vld [vmem:[%s246 + $0x50] sm:$0xff]
        %v255 = vld [vmem:[%s246 + $0x60] sm:$0xff]
        %v256 = vld [vmem:[%s246 + $0x68] sm:$0xff]
        %v257 = vld [vmem:[%s246 + $0x78] sm:$0xff]
        %v258 = vld [vmem:[%s246 + $0x80] sm:$0xff]
        %v259 = vld [vmem:[%s246 + $0x90] sm:$0xff]
        %v260 = vld [vmem:[%s246 + $0x98] sm:$0xff]
        %v261 = vld [vmem:[%s246 + $0xa8] sm:$0xff]
        %v262 = vld [vmem:[%s246 + $0xb0] sm:$0xff]
        %v263 = vld [vmem:[%s246 + $0x1] sm:$0xff]
        %v264 = vld [vmem:[%s246 + $0x9] sm:$0xff]
        %v265 = vld [vmem:[%s246 + $0x19] sm:$0xff]
        %v266 = vld [vmem:[%s246 + $0x21] sm:$0xff]
        %v267 = vld [vmem:[%s246 + $0x31] sm:$0xff]
        %v268 = vld [vmem:[%s246 + $0x39] sm:$0xff]
        %v269 = vld [vmem:[%s246 + $0x49] sm:$0xff]
        %v270 = vld [vmem:[%s246 + $0x51] sm:$0xff]
        %v271 = vld [vmem:[%s246 + $0x61] sm:$0xff]
        %v272 = vld [vmem:[%s246 + $0x69] sm:$0xff]
        %v273 = vld [vmem:[%s246 + $0x79] sm:$0xff]
        %v274 = vld [vmem:[%s246 + $0x81] sm:$0xff]
        %v275 = vld [vmem:[%s246 + $0x91] sm:$0xff]
        %v276 = vld [vmem:[%s246 + $0x99] sm:$0xff]
        %v277 = vld [vmem:[%s246 + $0xa9] sm:$0xff]
        %v278 = vld [vmem:[%s246 + $0xb1] sm:$0xff]
        %v279 = vld [vmem:[%s246 + $0x2] sm:$0xff]
        %v280 = vld [vmem:[%s246 + $0xa] sm:$0xff]
        %v281 = vld [vmem:[%s246 + $0x1a] sm:$0xff]
        %v282 = vld [vmem:[%s246 + $0x22] sm:$0xff]
        %v283 = vld [vmem:[%s246 + $0x32] sm:$0xff]
        %v284 = vld [vmem:[%s246 + $0x3a] sm:$0xff]
        %v285 = vld [vmem:[%s246 + $0x4a] sm:$0xff]
        %v286 = vld [vmem:[%s246 + $0x52] sm:$0xff]
        %v287 = vld [vmem:[%s246 + $0x62] sm:$0xff]
        %v288 = vld [vmem:[%s246 + $0x6a] sm:$0xff]
        %v289 = vld [vmem:[%s246 + $0x7a] sm:$0xff]
        %v290 = vld [vmem:[%s246 + $0x82] sm:$0xff]
        %v291 = vld [vmem:[%s246 + $0x92] sm:$0xff]
        %v292 = vld [vmem:[%s246 + $0x9a] sm:$0xff]
        %v293 = vld [vmem:[%s246 + $0xaa] sm:$0xff]
        %v294 = vld [vmem:[%s246 + $0xb2] sm:$0xff]
        %s295 = scalar_lea.vmem %s196, 48
        %v296 = vld [vmem:[%s295] sm:$0xff]
        %v297 = vld [vmem:[%s295 + $0x8] sm:$0xff]
        %v298 = vld [vmem:[%s295 + $0x18] sm:$0xff]
        %v299 = vld [vmem:[%s295 + $0x20] sm:$0xff]
        %v300 = vld [vmem:[%s295 + $0x30] sm:$0xff]
        %v301 = vld [vmem:[%s295 + $0x38] sm:$0xff]
        %v302 = vld [vmem:[%s295 + $0x48] sm:$0xff]
        %v303 = vld [vmem:[%s295 + $0x50] sm:$0xff]
        %v304 = vld [vmem:[%s295 + $0x60] sm:$0xff]
        %v305 = vld [vmem:[%s295 + $0x68] sm:$0xff]
        %v306 = vld [vmem:[%s295 + $0x78] sm:$0xff]
        %v307 = vld [vmem:[%s295 + $0x80] sm:$0xff]
        %v308 = vld [vmem:[%s295 + $0x90] sm:$0xff]
        %v309 = vld [vmem:[%s295 + $0x98] sm:$0xff]
        %v310 = vld [vmem:[%s295 + $0xa8] sm:$0xff]
        %v311 = vld [vmem:[%s295 + $0xb0] sm:$0xff]
        %v312 = vld [vmem:[%s295 + $0x1] sm:$0xff]
        %v313 = vld [vmem:[%s295 + $0x9] sm:$0xff]
        %v314 = vld [vmem:[%s295 + $0x19] sm:$0xff]
        %v315 = vld [vmem:[%s295 + $0x21] sm:$0xff]
        %v316 = vld [vmem:[%s295 + $0x31] sm:$0xff]
        %v317 = vld [vmem:[%s295 + $0x39] sm:$0xff]
        %v318 = vld [vmem:[%s295 + $0x49] sm:$0xff]
        %v319 = vld [vmem:[%s295 + $0x51] sm:$0xff]
        %v320 = vld [vmem:[%s295 + $0x61] sm:$0xff]
        %v321 = vld [vmem:[%s295 + $0x69] sm:$0xff]
        %v322 = vld [vmem:[%s295 + $0x79] sm:$0xff]
        %v323 = vld [vmem:[%s295 + $0x81] sm:$0xff]
        %v324 = vld [vmem:[%s295 + $0x91] sm:$0xff]
        %v325 = vld [vmem:[%s295 + $0x99] sm:$0xff]
        %v326 = vld [vmem:[%s295 + $0xa9] sm:$0xff]
        %v327 = vld [vmem:[%s295 + $0xb1] sm:$0xff]
        %v328 = vld [vmem:[%s295 + $0x2] sm:$0xff]
        %v329 = vld [vmem:[%s295 + $0xa] sm:$0xff]
        %v330 = vld [vmem:[%s295 + $0x1a] sm:$0xff]
        %v331 = vld [vmem:[%s295 + $0x22] sm:$0xff]
        %v332 = vld [vmem:[%s295 + $0x32] sm:$0xff]
        %v333 = vld [vmem:[%s295 + $0x3a] sm:$0xff]
        %v334 = vld [vmem:[%s295 + $0x4a] sm:$0xff]
        %v335 = vld [vmem:[%s295 + $0x52] sm:$0xff]
        %v336 = vld [vmem:[%s295 + $0x62] sm:$0xff]
        %v337 = vld [vmem:[%s295 + $0x6a] sm:$0xff]
        %v338 = vld [vmem:[%s295 + $0x7a] sm:$0xff]
        %v339 = vld [vmem:[%s295 + $0x82] sm:$0xff]
        %v340 = vld [vmem:[%s295 + $0x92] sm:$0xff]
        %v341 = vld [vmem:[%s295 + $0x9a] sm:$0xff]
        %v342 = vld [vmem:[%s295 + $0xaa] sm:$0xff]
        %v343 = vld [vmem:[%s295 + $0xb2] sm:$0xff]
        %v344 = vld [vmem:[%s1] sm:$0xff]
        %v345 = vld [vmem:[%s1 + $0x8] sm:$0xff]
        %v346 = vld [vmem:[%s1 + $0x10] sm:$0xff]
        %v347 = vld [vmem:[%s1 + $0x18] sm:$0xff]
        %v348 = vld [vmem:[%s1 + $0x20] sm:$0xff]
        %v349 = vld [vmem:[%s1 + $0x28] sm:$0xff]
        %v350 = vld [vmem:[%s1 + $0x30] sm:$0xff]
        %v351 = vld [vmem:[%s1 + $0x38] sm:$0xff]
        %v352 = vld [vmem:[%s1 + $0x40] sm:$0xff]
        %v353 = vld [vmem:[%s1 + $0x48] sm:$0xff]
        %v354 = vld [vmem:[%s1 + $0x50] sm:$0xff]
        %v355 = vld [vmem:[%s1 + $0x58] sm:$0xff]
        %v356 = vld [vmem:[%s1 + $0x60] sm:$0xff]
        %v357 = vld [vmem:[%s1 + $0x68] sm:$0xff]
        %v358 = vld [vmem:[%s1 + $0x70] sm:$0xff]
        %v359 = vld [vmem:[%s1 + $0x78] sm:$0xff]
        %v360 = vld [vmem:[%s1 + $0x80] sm:$0xff]
        %v361 = vld [vmem:[%s1 + $0x88] sm:$0xff]
        %v362 = vld [vmem:[%s1 + $0x90] sm:$0xff]
        %v363 = vld [vmem:[%s1 + $0x98] sm:$0xff]
        %v364 = vld [vmem:[%s1 + $0xa0] sm:$0xff]
        %v365 = vld [vmem:[%s1 + $0xa8] sm:$0xff]
        %v366 = vld [vmem:[%s1 + $0xb0] sm:$0xff]
        %v367 = vld [vmem:[%s1 + $0xb8] sm:$0xff]
        %v368 = vld [vmem:[%s1 + $0xc0] sm:$0xff]
        %v369 = vld [vmem:[%s1 + $0xc8] sm:$0xff]
        %v370 = vld [vmem:[%s1 + $0xd0] sm:$0xff]
        %v371 = vld [vmem:[%s1 + $0xd8] sm:$0xff]
        %v372 = vld [vmem:[%s1 + $0xe0] sm:$0xff]
        %v373 = vld [vmem:[%s1 + $0xe8] sm:$0xff]
        %v374 = vld [vmem:[%s1 + $0xf0] sm:$0xff]
        %v375 = vld [vmem:[%s1 + $0xf8] sm:$0xff]
        %v376 = vld [vmem:[%s1 + $0x100] sm:$0xff]
        %v377 = vld [vmem:[%s1 + $0x108] sm:$0xff]
        %v378 = vld [vmem:[%s1 + $0x110] sm:$0xff]
        %v379 = vld [vmem:[%s1 + $0x118] sm:$0xff]
        %v380 = vld [vmem:[%s1 + $0x120] sm:$0xff]
        %v381 = vld [vmem:[%s1 + $0x128] sm:$0xff]
        %v382 = vld [vmem:[%s1 + $0x130] sm:$0xff]
        %v383 = vld [vmem:[%s1 + $0x138] sm:$0xff]
        %v384 = vld [vmem:[%s1 + $0x140] sm:$0xff]
        %v385 = vld [vmem:[%s1 + $0x148] sm:$0xff]
        %v386 = vld [vmem:[%s1 + $0x150] sm:$0xff]
        %v387 = vld [vmem:[%s1 + $0x158] sm:$0xff]
        %v388 = vld [vmem:[%s1 + $0x160] sm:$0xff]
        %v389 = vld [vmem:[%s1 + $0x168] sm:$0xff]
        %v390 = vld [vmem:[%s1 + $0x170] sm:$0xff]
        %v391 = vld [vmem:[%s1 + $0x178] sm:$0xff]
        %v392 = vld [vmem:[%s1 + $0x180] sm:$0xff]
        %v393 = vld [vmem:[%s1 + $0x188] sm:$0xff]
        %v394 = vld [vmem:[%s1 + $0x190] sm:$0xff]
        %v395 = vld [vmem:[%s1 + $0x198] sm:$0xff]
        %v396 = vld [vmem:[%s1 + $0x1a0] sm:$0xff]
        %v397 = vld [vmem:[%s1 + $0x1a8] sm:$0xff]
        %v398 = vld [vmem:[%s1 + $0x1b0] sm:$0xff]
        %v399 = vld [vmem:[%s1 + $0x1b8] sm:$0xff]
        %v400 = vld [vmem:[%s1 + $0x1c0] sm:$0xff]
        %v401 = vld [vmem:[%s1 + $0x1c8] sm:$0xff]
        %v402 = vld [vmem:[%s1 + $0x1d0] sm:$0xff]
        %v403 = vld [vmem:[%s1 + $0x1d8] sm:$0xff]
        %v404 = vld [vmem:[%s1 + $0x1e0] sm:$0xff]
        %v405 = vld [vmem:[%s1 + $0x1e8] sm:$0xff]
        %v406 = vld [vmem:[%s1 + $0x1f0] sm:$0xff]
        %v407 = vld [vmem:[%s1 + $0x1f8] sm:$0xff]
        %v408 = vld [vmem:[%s1 + $0x200] sm:$0xff]
        %v409 = vld [vmem:[%s1 + $0x208] sm:$0xff]
        %v410 = vld [vmem:[%s1 + $0x210] sm:$0xff]
        %v411 = vld [vmem:[%s1 + $0x218] sm:$0xff]
        %v412 = vld [vmem:[%s1 + $0x220] sm:$0xff]
        %v413 = vld [vmem:[%s1 + $0x228] sm:$0xff]
        %v414 = vld [vmem:[%s1 + $0x230] sm:$0xff]
        %v415 = vld [vmem:[%s1 + $0x238] sm:$0xff]
        %v416 = vld [vmem:[%s1 + $0x240] sm:$0xff]
        %v417 = vld [vmem:[%s1 + $0x248] sm:$0xff]
        %v418 = vld [vmem:[%s1 + $0x250] sm:$0xff]
        %v419 = vld [vmem:[%s1 + $0x258] sm:$0xff]
        %v420 = vld [vmem:[%s1 + $0x260] sm:$0xff]
        %v421 = vld [vmem:[%s1 + $0x268] sm:$0xff]
        %v422 = vld [vmem:[%s1 + $0x270] sm:$0xff]
        %v423 = vld [vmem:[%s1 + $0x278] sm:$0xff]
        %v424 = vld [vmem:[%s1 + $0x280] sm:$0xff]
        %v425 = vld [vmem:[%s1 + $0x288] sm:$0xff]
        %v426 = vld [vmem:[%s1 + $0x290] sm:$0xff]
        %v427 = vld [vmem:[%s1 + $0x298] sm:$0xff]
        %v428 = vld [vmem:[%s1 + $0x2a0] sm:$0xff]
        %v429 = vld [vmem:[%s1 + $0x2a8] sm:$0xff]
        %v430 = vld [vmem:[%s1 + $0x2b0] sm:$0xff]
        %v431 = vld [vmem:[%s1 + $0x2b8] sm:$0xff]
        %v432 = vld [vmem:[%s1 + $0x2c0] sm:$0xff]
        %v433 = vld [vmem:[%s1 + $0x2c8] sm:$0xff]
        %v434 = vld [vmem:[%s1 + $0x2d0] sm:$0xff]
        %v435 = vld [vmem:[%s1 + $0x2d8] sm:$0xff]
        %v436 = vld [vmem:[%s1 + $0x2e0] sm:$0xff]
        %v437 = vld [vmem:[%s1 + $0x2e8] sm:$0xff]
        %v438 = vld [vmem:[%s1 + $0x2f0] sm:$0xff]
        %v439 = vld [vmem:[%s1 + $0x2f8] sm:$0xff]
        %v440 = vld [vmem:[%s1 + $0x300] sm:$0xff]
        %v441 = vld [vmem:[%s1 + $0x308] sm:$0xff]
        %v442 = vld [vmem:[%s1 + $0x310] sm:$0xff]
        %v443 = vld [vmem:[%s1 + $0x318] sm:$0xff]
        %v444 = vld [vmem:[%s1 + $0x320] sm:$0xff]
        %v445 = vld [vmem:[%s1 + $0x328] sm:$0xff]
        %v446 = vld [vmem:[%s1 + $0x330] sm:$0xff]
        %v447 = vld [vmem:[%s1 + $0x338] sm:$0xff]
        %v448 = vld [vmem:[%s1 + $0x340] sm:$0xff]
        %v449 = vld [vmem:[%s1 + $0x348] sm:$0xff]
        %v450 = vld [vmem:[%s1 + $0x350] sm:$0xff]
        %v451 = vld [vmem:[%s1 + $0x358] sm:$0xff]
        %v452 = vld [vmem:[%s1 + $0x360] sm:$0xff]
        %v453 = vld [vmem:[%s1 + $0x368] sm:$0xff]
        %v454 = vld [vmem:[%s1 + $0x370] sm:$0xff]
        %v455 = vld [vmem:[%s1 + $0x378] sm:$0xff]
        %v456 = vld [vmem:[%s1 + $0x380] sm:$0xff]
        %v457 = vld [vmem:[%s1 + $0x388] sm:$0xff]
        %v458 = vld [vmem:[%s1 + $0x390] sm:$0xff]
        %v459 = vld [vmem:[%s1 + $0x398] sm:$0xff]
        %v460 = vld [vmem:[%s1 + $0x3a0] sm:$0xff]
        %v461 = vld [vmem:[%s1 + $0x3a8] sm:$0xff]
        %v462 = vld [vmem:[%s1 + $0x3b0] sm:$0xff]
        %v463 = vld [vmem:[%s1 + $0x3b8] sm:$0xff]
        %v464 = vld [vmem:[%s1 + $0x3c0] sm:$0xff]
        %v465 = vld [vmem:[%s1 + $0x3c8] sm:$0xff]
        %v466 = vld [vmem:[%s1 + $0x3d0] sm:$0xff]
        %v467 = vld [vmem:[%s1 + $0x3d8] sm:$0xff]
        %v468 = vld [vmem:[%s1 + $0x3e0] sm:$0xff]
        %v469 = vld [vmem:[%s1 + $0x3e8] sm:$0xff]
        %v470 = vld [vmem:[%s1 + $0x3f0] sm:$0xff]
        %v471 = vld [vmem:[%s1 + $0x3f8] sm:$0xff]
        %v472 = vld [vmem:[%s1 + $0x400] sm:$0xff]
        %v473 = vld [vmem:[%s1 + $0x408] sm:$0xff]
        %v474 = vld [vmem:[%s1 + $0x410] sm:$0xff]
        %v475 = vld [vmem:[%s1 + $0x418] sm:$0xff]
        %v476 = vld [vmem:[%s1 + $0x420] sm:$0xff]
        %v477 = vld [vmem:[%s1 + $0x428] sm:$0xff]
        %v478 = vld [vmem:[%s1 + $0x430] sm:$0xff]
        %v479 = vld [vmem:[%s1 + $0x438] sm:$0xff]
        %v480 = vld [vmem:[%s1 + $0x440] sm:$0xff]
        %v481 = vld [vmem:[%s1 + $0x448] sm:$0xff]
        %v482 = vld [vmem:[%s1 + $0x450] sm:$0xff]
        %v483 = vld [vmem:[%s1 + $0x458] sm:$0xff]
        %v484 = vld [vmem:[%s1 + $0x460] sm:$0xff]
        %v485 = vld [vmem:[%s1 + $0x468] sm:$0xff]
        %v486 = vld [vmem:[%s1 + $0x470] sm:$0xff]
        %v487 = vld [vmem:[%s1 + $0x478] sm:$0xff]
        %488 = vmatpush.msra.mxu0 %v359
        %489 = vmatpush.msra.mxu0 %v358
        %490 = vmatpush.msra.mxu0 %v357
        %491 = vmatpush.msra.mxu0 %v356
        %492 = vmatpush.msra.mxu0 %v355
        %493 = vmatpush.msra.mxu0 %v354
        %494 = vmatpush.msra.mxu0 %v353
        %495 = vmatpush.msra.mxu0 %v352
        %496 = vmatpush.msra.mxu0 %v351
        %497 = vmatpush.msra.mxu0 %v350
        %498 = vmatpush.msra.mxu0 %v349
        %499 = vmatpush.msra.mxu0 %v348
        %500 = vmatpush.msra.mxu0 %v347
        %501 = vmatpush.msra.mxu0 %v346
        %502 = vmatpush.msra.mxu0 %v345
        %503 = vmatpush.msra.mxu0 %v344
        %504 = vmatmul.f32.gmra.mxu0 %v198
        %v505 = vpop.f32.mrf.mxu0
        %v506 = vadd.f32 0.0, %v505
        %507 = vmatmul.f32.gmra.mxu0 %v199
        %v508 = vpop.f32.mrf.mxu0
        %v509 = vadd.f32 0.0, %v508
        %510 = vmatmul.f32.gmra.mxu0 %v200
        %v511 = vpop.f32.mrf.mxu0
        %v512 = vadd.f32 0.0, %v511
        %513 = vmatmul.f32.gmra.mxu0 %v201
        %v514 = vpop.f32.mrf.mxu0
        %v515 = vadd.f32 0.0, %v514
        %516 = vmatmul.f32.gmra.mxu0 %v202
        %v517 = vpop.f32.mrf.mxu0
        %v518 = vadd.f32 0.0, %v517
        %519 = vmatmul.f32.gmra.mxu0 %v203
        %v520 = vpop.f32.mrf.mxu0
        %v521 = vadd.f32 0.0, %v520
        %522 = vmatmul.f32.gmra.mxu0 %v204
        %v523 = vpop.f32.mrf.mxu0
        %v524 = vadd.f32 0.0, %v523
        %525 = vmatmul.f32.gmra.mxu0 %v205
        %v526 = vpop.f32.mrf.mxu0
        %v527 = vadd.f32 0.0, %v526
        %528 = vmatmul.f32.gmra.mxu0 %v206
        %v529 = vpop.f32.mrf.mxu0
        %v530 = vadd.f32 0.0, %v529
        %531 = vmatmul.f32.gmra.mxu0 %v207
        %v532 = vpop.f32.mrf.mxu0
        %v533 = vadd.f32 0.0, %v532
        %534 = vmatmul.f32.gmra.mxu0 %v208
        %v535 = vpop.f32.mrf.mxu0
        %v536 = vadd.f32 0.0, %v535
        %537 = vmatmul.f32.gmra.mxu0 %v209
        %v538 = vpop.f32.mrf.mxu0
        %v539 = vadd.f32 0.0, %v538
        %540 = vmatmul.f32.gmra.mxu0 %v210
        %v541 = vpop.f32.mrf.mxu0
        %v542 = vadd.f32 0.0, %v541
        %543 = vmatmul.f32.gmra.mxu0 %v211
        %v544 = vpop.f32.mrf.mxu0
        %v545 = vadd.f32 0.0, %v544
        %546 = vmatmul.f32.gmra.mxu0 %v212
        %v547 = vpop.f32.mrf.mxu0
        %v548 = vadd.f32 0.0, %v547
        %549 = vmatmul.f32.gmra.mxu0 %v213
        %v550 = vpop.f32.mrf.mxu0
        %v551 = vadd.f32 0.0, %v550
        %552 = vdwg.mxu0
        %553 = vmatpush.msra.mxu0 %v375
        %554 = vmatpush.msra.mxu0 %v374
        %555 = vmatpush.msra.mxu0 %v373
        %556 = vmatpush.msra.mxu0 %v372
        %557 = vmatpush.msra.mxu0 %v371
        %558 = vmatpush.msra.mxu0 %v370
        %559 = vmatpush.msra.mxu0 %v369
        %560 = vmatpush.msra.mxu0 %v368
        %561 = vmatpush.msra.mxu0 %v367
        %562 = vmatpush.msra.mxu0 %v366
        %563 = vmatpush.msra.mxu0 %v365
        %564 = vmatpush.msra.mxu0 %v364
        %565 = vmatpush.msra.mxu0 %v363
        %566 = vmatpush.msra.mxu0 %v362
        %567 = vmatpush.msra.mxu0 %v361
        %568 = vmatpush.msra.mxu0 %v360
        %569 = vmatmul.f32.gmra.mxu0 %v214
        %v570 = vpop.f32.mrf.mxu0
        %v571 = vadd.f32 %v506, %v570
        %572 = vmatmul.f32.gmra.mxu0 %v215
        %v573 = vpop.f32.mrf.mxu0
        %v574 = vadd.f32 %v509, %v573
        %575 = vmatmul.f32.gmra.mxu0 %v216
        %v576 = vpop.f32.mrf.mxu0
        %v577 = vadd.f32 %v512, %v576
        %578 = vmatmul.f32.gmra.mxu0 %v217
        %v579 = vpop.f32.mrf.mxu0
        %v580 = vadd.f32 %v515, %v579
        %581 = vmatmul.f32.gmra.mxu0 %v218
        %v582 = vpop.f32.mrf.mxu0
        %v583 = vadd.f32 %v518, %v582
        %584 = vmatmul.f32.gmra.mxu0 %v219
        %v585 = vpop.f32.mrf.mxu0
        %v586 = vadd.f32 %v521, %v585
        %587 = vmatmul.f32.gmra.mxu0 %v220
        %v588 = vpop.f32.mrf.mxu0
        %v589 = vadd.f32 %v524, %v588
        %590 = vmatmul.f32.gmra.mxu0 %v221
        %v591 = vpop.f32.mrf.mxu0
        %v592 = vadd.f32 %v527, %v591
        %593 = vmatmul.f32.gmra.mxu0 %v222
        %v594 = vpop.f32.mrf.mxu0
        %v595 = vadd.f32 %v530, %v594
        %596 = vmatmul.f32.gmra.mxu0 %v223
        %v597 = vpop.f32.mrf.mxu0
        %v598 = vadd.f32 %v533, %v597
        %599 = vmatmul.f32.gmra.mxu0 %v224
        %v600 = vpop.f32.mrf.mxu0
        %v601 = vadd.f32 %v536, %v600
        %602 = vmatmul.f32.gmra.mxu0 %v225
        %v603 = vpop.f32.mrf.mxu0
        %v604 = vadd.f32 %v539, %v603
        %605 = vmatmul.f32.gmra.mxu0 %v226
        %v606 = vpop.f32.mrf.mxu0
        %v607 = vadd.f32 %v542, %v606
        %608 = vmatmul.f32.gmra.mxu0 %v227
        %v609 = vpop.f32.mrf.mxu0
        %v610 = vadd.f32 %v545, %v609
        %611 = vmatmul.f32.gmra.mxu0 %v228
        %v612 = vpop.f32.mrf.mxu0
        %v613 = vadd.f32 %v548, %v612
        %614 = vmatmul.f32.gmra.mxu0 %v229
        %v615 = vpop.f32.mrf.mxu0
        %v616 = vadd.f32 %v551, %v615
        %617 = vdwg.mxu0
        %618 = vmatpush.msra.mxu0 %v391
        %619 = vmatpush.msra.mxu0 %v390
        %620 = vmatpush.msra.mxu0 %v389
        %621 = vmatpush.msra.mxu0 %v388
        %622 = vmatpush.msra.mxu0 %v387
        %623 = vmatpush.msra.mxu0 %v386
        %624 = vmatpush.msra.mxu0 %v385
        %625 = vmatpush.msra.mxu0 %v384
        %626 = vmatpush.msra.mxu0 %v383
        %627 = vmatpush.msra.mxu0 %v382
        %628 = vmatpush.msra.mxu0 %v381
        %629 = vmatpush.msra.mxu0 %v380
        %630 = vmatpush.msra.mxu0 %v379
        %631 = vmatpush.msra.mxu0 %v378
        %632 = vmatpush.msra.mxu0 %v377
        %633 = vmatpush.msra.mxu0 %v376
        %634 = vmatmul.f32.gmra.mxu0 %v230
        %v635 = vpop.f32.mrf.mxu0
        %v636 = vadd.f32 %v571, %v635
        %637 = vmatmul.f32.gmra.mxu0 %v231
        %v638 = vpop.f32.mrf.mxu0
        %v639 = vadd.f32 %v574, %v638
        %640 = vmatmul.f32.gmra.mxu0 %v232
        %v641 = vpop.f32.mrf.mxu0
        %v642 = vadd.f32 %v577, %v641
        %643 = vmatmul.f32.gmra.mxu0 %v233
        %v644 = vpop.f32.mrf.mxu0
        %v645 = vadd.f32 %v580, %v644
        %646 = vmatmul.f32.gmra.mxu0 %v234
        %v647 = vpop.f32.mrf.mxu0
        %v648 = vadd.f32 %v583, %v647
        %649 = vmatmul.f32.gmra.mxu0 %v235
        %v650 = vpop.f32.mrf.mxu0
        %v651 = vadd.f32 %v586, %v650
        %652 = vmatmul.f32.gmra.mxu0 %v236
        %v653 = vpop.f32.mrf.mxu0
        %v654 = vadd.f32 %v589, %v653
        %655 = vmatmul.f32.gmra.mxu0 %v237
        %v656 = vpop.f32.mrf.mxu0
        %v657 = vadd.f32 %v592, %v656
        %658 = vmatmul.f32.gmra.mxu0 %v238
        %v659 = vpop.f32.mrf.mxu0
        %v660 = vadd.f32 %v595, %v659
        %661 = vmatmul.f32.gmra.mxu0 %v239
        %v662 = vpop.f32.mrf.mxu0
        %v663 = vadd.f32 %v598, %v662
        %664 = vmatmul.f32.gmra.mxu0 %v240
        %v665 = vpop.f32.mrf.mxu0
        %v666 = vadd.f32 %v601, %v665
        %667 = vmatmul.f32.gmra.mxu0 %v241
        %v668 = vpop.f32.mrf.mxu0
        %v669 = vadd.f32 %v604, %v668
        %670 = vmatmul.f32.gmra.mxu0 %v242
        %v671 = vpop.f32.mrf.mxu0
        %v672 = vadd.f32 %v607, %v671
        %673 = vmatmul.f32.gmra.mxu0 %v243
        %v674 = vpop.f32.mrf.mxu0
        %v675 = vadd.f32 %v610, %v674
        %676 = vmatmul.f32.gmra.mxu0 %v244
        %v677 = vpop.f32.mrf.mxu0
        %v678 = vadd.f32 %v613, %v677
        %679 = vmatmul.f32.gmra.mxu0 %v245
        %v680 = vpop.f32.mrf.mxu0
        %v681 = vadd.f32 %v616, %v680
        %682 = vdwg.mxu0
        %683 = vmatpush.msra.mxu0 %v407
        %684 = vmatpush.msra.mxu0 %v406
        %685 = vmatpush.msra.mxu0 %v405
        %686 = vmatpush.msra.mxu0 %v404
        %687 = vmatpush.msra.mxu0 %v403
        %688 = vmatpush.msra.mxu0 %v402
        %689 = vmatpush.msra.mxu0 %v401
        %690 = vmatpush.msra.mxu0 %v400
        %691 = vmatpush.msra.mxu0 %v399
        %692 = vmatpush.msra.mxu0 %v398
        %693 = vmatpush.msra.mxu0 %v397
        %694 = vmatpush.msra.mxu0 %v396
        %695 = vmatpush.msra.mxu0 %v395
        %696 = vmatpush.msra.mxu0 %v394
        %697 = vmatpush.msra.mxu0 %v393
        %698 = vmatpush.msra.mxu0 %v392
        %699 = vmatmul.f32.gmra.mxu0 %v247
        %v700 = vpop.f32.mrf.mxu0
        %v701 = vadd.f32 %v636, %v700
        %702 = vmatmul.f32.gmra.mxu0 %v248
        %v703 = vpop.f32.mrf.mxu0
        %v704 = vadd.f32 %v639, %v703
        %705 = vmatmul.f32.gmra.mxu0 %v249
        %v706 = vpop.f32.mrf.mxu0
        %v707 = vadd.f32 %v642, %v706
        %708 = vmatmul.f32.gmra.mxu0 %v250
        %v709 = vpop.f32.mrf.mxu0
        %v710 = vadd.f32 %v645, %v709
        %711 = vmatmul.f32.gmra.mxu0 %v251
        %v712 = vpop.f32.mrf.mxu0
        %v713 = vadd.f32 %v648, %v712
        %714 = vmatmul.f32.gmra.mxu0 %v252
        %v715 = vpop.f32.mrf.mxu0
        %v716 = vadd.f32 %v651, %v715
        %717 = vmatmul.f32.gmra.mxu0 %v253
        %v718 = vpop.f32.mrf.mxu0
        %v719 = vadd.f32 %v654, %v718
        %720 = vmatmul.f32.gmra.mxu0 %v254
        %v721 = vpop.f32.mrf.mxu0
        %v722 = vadd.f32 %v657, %v721
        %723 = vmatmul.f32.gmra.mxu0 %v255
        %v724 = vpop.f32.mrf.mxu0
        %v725 = vadd.f32 %v660, %v724
        %726 = vmatmul.f32.gmra.mxu0 %v256
        %v727 = vpop.f32.mrf.mxu0
        %v728 = vadd.f32 %v663, %v727
        %729 = vmatmul.f32.gmra.mxu0 %v257
        %v730 = vpop.f32.mrf.mxu0
        %v731 = vadd.f32 %v666, %v730
        %732 = vmatmul.f32.gmra.mxu0 %v258
        %v733 = vpop.f32.mrf.mxu0
        %v734 = vadd.f32 %v669, %v733
        %735 = vmatmul.f32.gmra.mxu0 %v259
        %v736 = vpop.f32.mrf.mxu0
        %v737 = vadd.f32 %v672, %v736
        %738 = vmatmul.f32.gmra.mxu0 %v260
        %v739 = vpop.f32.mrf.mxu0
        %v740 = vadd.f32 %v675, %v739
        %741 = vmatmul.f32.gmra.mxu0 %v261
        %v742 = vpop.f32.mrf.mxu0
        %v743 = vadd.f32 %v678, %v742
        %744 = vmatmul.f32.gmra.mxu0 %v262
        %v745 = vpop.f32.mrf.mxu0
        %v746 = vadd.f32 %v681, %v745
        %747 = vdwg.mxu0
        %748 = vmatpush.msra.mxu0 %v423
        %749 = vmatpush.msra.mxu0 %v422
        %750 = vmatpush.msra.mxu0 %v421
        %751 = vmatpush.msra.mxu0 %v420
        %752 = vmatpush.msra.mxu0 %v419
        %753 = vmatpush.msra.mxu0 %v418
        %754 = vmatpush.msra.mxu0 %v417
        %755 = vmatpush.msra.mxu0 %v416
        %756 = vmatpush.msra.mxu0 %v415
        %757 = vmatpush.msra.mxu0 %v414
        %758 = vmatpush.msra.mxu0 %v413
        %759 = vmatpush.msra.mxu0 %v412
        %760 = vmatpush.msra.mxu0 %v411
        %761 = vmatpush.msra.mxu0 %v410
        %762 = vmatpush.msra.mxu0 %v409
        %763 = vmatpush.msra.mxu0 %v408
        %764 = vmatmul.f32.gmra.mxu0 %v263
        %v765 = vpop.f32.mrf.mxu0
        %v766 = vadd.f32 %v701, %v765
        %767 = vmatmul.f32.gmra.mxu0 %v264
        %v768 = vpop.f32.mrf.mxu0
        %v769 = vadd.f32 %v704, %v768
        %770 = vmatmul.f32.gmra.mxu0 %v265
        %v771 = vpop.f32.mrf.mxu0
        %v772 = vadd.f32 %v707, %v771
        %773 = vmatmul.f32.gmra.mxu0 %v266
        %v774 = vpop.f32.mrf.mxu0
        %v775 = vadd.f32 %v710, %v774
        %776 = vmatmul.f32.gmra.mxu0 %v267
        %v777 = vpop.f32.mrf.mxu0
        %v778 = vadd.f32 %v713, %v777
        %779 = vmatmul.f32.gmra.mxu0 %v268
        %v780 = vpop.f32.mrf.mxu0
        %v781 = vadd.f32 %v716, %v780
        %782 = vmatmul.f32.gmra.mxu0 %v269
        %v783 = vpop.f32.mrf.mxu0
        %v784 = vadd.f32 %v719, %v783
        %785 = vmatmul.f32.gmra.mxu0 %v270
        %v786 = vpop.f32.mrf.mxu0
        %v787 = vadd.f32 %v722, %v786
        %788 = vmatmul.f32.gmra.mxu0 %v271
        %v789 = vpop.f32.mrf.mxu0
        %v790 = vadd.f32 %v725, %v789
        %791 = vmatmul.f32.gmra.mxu0 %v272
        %v792 = vpop.f32.mrf.mxu0
        %v793 = vadd.f32 %v728, %v792
        %794 = vmatmul.f32.gmra.mxu0 %v273
        %v795 = vpop.f32.mrf.mxu0
        %v796 = vadd.f32 %v731, %v795
        %797 = vmatmul.f32.gmra.mxu0 %v274
        %v798 = vpop.f32.mrf.mxu0
        %v799 = vadd.f32 %v734, %v798
        %800 = vmatmul.f32.gmra.mxu0 %v275
        %v801 = vpop.f32.mrf.mxu0
        %v802 = vadd.f32 %v737, %v801
        %803 = vmatmul.f32.gmra.mxu0 %v276
        %v804 = vpop.f32.mrf.mxu0
        %v805 = vadd.f32 %v740, %v804
        %806 = vmatmul.f32.gmra.mxu0 %v277
        %v807 = vpop.f32.mrf.mxu0
        %v808 = vadd.f32 %v743, %v807
        %809 = vmatmul.f32.gmra.mxu0 %v278
        %v810 = vpop.f32.mrf.mxu0
        %v811 = vadd.f32 %v746, %v810
        %812 = vdwg.mxu0
        %813 = vmatpush.msra.mxu0 %v439
        %814 = vmatpush.msra.mxu0 %v438
        %815 = vmatpush.msra.mxu0 %v437
        %816 = vmatpush.msra.mxu0 %v436
        %817 = vmatpush.msra.mxu0 %v435
        %818 = vmatpush.msra.mxu0 %v434
        %819 = vmatpush.msra.mxu0 %v433
        %820 = vmatpush.msra.mxu0 %v432
        %821 = vmatpush.msra.mxu0 %v431
        %822 = vmatpush.msra.mxu0 %v430
        %823 = vmatpush.msra.mxu0 %v429
        %824 = vmatpush.msra.mxu0 %v428
        %825 = vmatpush.msra.mxu0 %v427
        %826 = vmatpush.msra.mxu0 %v426
        %827 = vmatpush.msra.mxu0 %v425
        %828 = vmatpush.msra.mxu0 %v424
        %829 = vmatmul.f32.gmra.mxu0 %v279
        %v830 = vpop.f32.mrf.mxu0
        %v831 = vadd.f32 %v766, %v830
        %832 = vmatmul.f32.gmra.mxu0 %v280
        %v833 = vpop.f32.mrf.mxu0
        %v834 = vadd.f32 %v769, %v833
        %835 = vmatmul.f32.gmra.mxu0 %v281
        %v836 = vpop.f32.mrf.mxu0
        %v837 = vadd.f32 %v772, %v836
        %838 = vmatmul.f32.gmra.mxu0 %v282
        %v839 = vpop.f32.mrf.mxu0
        %v840 = vadd.f32 %v775, %v839
        %841 = vmatmul.f32.gmra.mxu0 %v283
        %v842 = vpop.f32.mrf.mxu0
        %v843 = vadd.f32 %v778, %v842
        %844 = vmatmul.f32.gmra.mxu0 %v284
        %v845 = vpop.f32.mrf.mxu0
        %v846 = vadd.f32 %v781, %v845
        %847 = vmatmul.f32.gmra.mxu0 %v285
        %v848 = vpop.f32.mrf.mxu0
        %v849 = vadd.f32 %v784, %v848
        %850 = vmatmul.f32.gmra.mxu0 %v286
        %v851 = vpop.f32.mrf.mxu0
        %v852 = vadd.f32 %v787, %v851
        %853 = vmatmul.f32.gmra.mxu0 %v287
        %v854 = vpop.f32.mrf.mxu0
        %v855 = vadd.f32 %v790, %v854
        %856 = vmatmul.f32.gmra.mxu0 %v288
        %v857 = vpop.f32.mrf.mxu0
        %v858 = vadd.f32 %v793, %v857
        %859 = vmatmul.f32.gmra.mxu0 %v289
        %v860 = vpop.f32.mrf.mxu0
        %v861 = vadd.f32 %v796, %v860
        %862 = vmatmul.f32.gmra.mxu0 %v290
        %v863 = vpop.f32.mrf.mxu0
        %v864 = vadd.f32 %v799, %v863
        %865 = vmatmul.f32.gmra.mxu0 %v291
        %v866 = vpop.f32.mrf.mxu0
        %v867 = vadd.f32 %v802, %v866
        %868 = vmatmul.f32.gmra.mxu0 %v292
        %v869 = vpop.f32.mrf.mxu0
        %v870 = vadd.f32 %v805, %v869
        %871 = vmatmul.f32.gmra.mxu0 %v293
        %v872 = vpop.f32.mrf.mxu0
        %v873 = vadd.f32 %v808, %v872
        %874 = vmatmul.f32.gmra.mxu0 %v294
        %v875 = vpop.f32.mrf.mxu0
        %v876 = vadd.f32 %v811, %v875
        %877 = vdwg.mxu0
        %878 = vmatpush.msra.mxu0 %v455
        %879 = vmatpush.msra.mxu0 %v454
        %880 = vmatpush.msra.mxu0 %v453
        %881 = vmatpush.msra.mxu0 %v452
        %882 = vmatpush.msra.mxu0 %v451
        %883 = vmatpush.msra.mxu0 %v450
        %884 = vmatpush.msra.mxu0 %v449
        %885 = vmatpush.msra.mxu0 %v448
        %886 = vmatpush.msra.mxu0 %v447
        %887 = vmatpush.msra.mxu0 %v446
        %888 = vmatpush.msra.mxu0 %v445
        %889 = vmatpush.msra.mxu0 %v444
        %890 = vmatpush.msra.mxu0 %v443
        %891 = vmatpush.msra.mxu0 %v442
        %892 = vmatpush.msra.mxu0 %v441
        %893 = vmatpush.msra.mxu0 %v440
        %894 = vmatmul.f32.gmra.mxu0 %v296
        %v895 = vpop.f32.mrf.mxu0
        %v896 = vadd.f32 %v831, %v895
        %897 = vmatmul.f32.gmra.mxu0 %v297
        %v898 = vpop.f32.mrf.mxu0
        %v899 = vadd.f32 %v834, %v898
        %900 = vmatmul.f32.gmra.mxu0 %v298
        %v901 = vpop.f32.mrf.mxu0
        %v902 = vadd.f32 %v837, %v901
        %903 = vmatmul.f32.gmra.mxu0 %v299
        %v904 = vpop.f32.mrf.mxu0
        %v905 = vadd.f32 %v840, %v904
        %906 = vmatmul.f32.gmra.mxu0 %v300
        %v907 = vpop.f32.mrf.mxu0
        %v908 = vadd.f32 %v843, %v907
        %909 = vmatmul.f32.gmra.mxu0 %v301
        %v910 = vpop.f32.mrf.mxu0
        %v911 = vadd.f32 %v846, %v910
        %912 = vmatmul.f32.gmra.mxu0 %v302
        %v913 = vpop.f32.mrf.mxu0
        %v914 = vadd.f32 %v849, %v913
        %915 = vmatmul.f32.gmra.mxu0 %v303
        %v916 = vpop.f32.mrf.mxu0
        %v917 = vadd.f32 %v852, %v916
        %918 = vmatmul.f32.gmra.mxu0 %v304
        %v919 = vpop.f32.mrf.mxu0
        %v920 = vadd.f32 %v855, %v919
        %921 = vmatmul.f32.gmra.mxu0 %v305
        %v922 = vpop.f32.mrf.mxu0
        %v923 = vadd.f32 %v858, %v922
        %924 = vmatmul.f32.gmra.mxu0 %v306
        %v925 = vpop.f32.mrf.mxu0
        %v926 = vadd.f32 %v861, %v925
        %927 = vmatmul.f32.gmra.mxu0 %v307
        %v928 = vpop.f32.mrf.mxu0
        %v929 = vadd.f32 %v864, %v928
        %930 = vmatmul.f32.gmra.mxu0 %v308
        %v931 = vpop.f32.mrf.mxu0
        %v932 = vadd.f32 %v867, %v931
        %933 = vmatmul.f32.gmra.mxu0 %v309
        %v934 = vpop.f32.mrf.mxu0
        %v935 = vadd.f32 %v870, %v934
        %936 = vmatmul.f32.gmra.mxu0 %v310
        %v937 = vpop.f32.mrf.mxu0
        %v938 = vadd.f32 %v873, %v937
        %939 = vmatmul.f32.gmra.mxu0 %v311
        %v940 = vpop.f32.mrf.mxu0
        %v941 = vadd.f32 %v876, %v940
        %942 = vdwg.mxu0
        %943 = vmatpush.msra.mxu0 %v471
        %944 = vmatpush.msra.mxu0 %v470
        %945 = vmatpush.msra.mxu0 %v469
        %946 = vmatpush.msra.mxu0 %v468
        %947 = vmatpush.msra.mxu0 %v467
        %948 = vmatpush.msra.mxu0 %v466
        %949 = vmatpush.msra.mxu0 %v465
        %950 = vmatpush.msra.mxu0 %v464
        %951 = vmatpush.msra.mxu0 %v463
        %952 = vmatpush.msra.mxu0 %v462
        %953 = vmatpush.msra.mxu0 %v461
        %954 = vmatpush.msra.mxu0 %v460
        %955 = vmatpush.msra.mxu0 %v459
        %956 = vmatpush.msra.mxu0 %v458
        %957 = vmatpush.msra.mxu0 %v457
        %958 = vmatpush.msra.mxu0 %v456
        %959 = vmatmul.f32.gmra.mxu0 %v312
        %v960 = vpop.f32.mrf.mxu0
        %v961 = vadd.f32 %v896, %v960
        %962 = vmatmul.f32.gmra.mxu0 %v313
        %v963 = vpop.f32.mrf.mxu0
        %v964 = vadd.f32 %v899, %v963
        %965 = vmatmul.f32.gmra.mxu0 %v314
        %v966 = vpop.f32.mrf.mxu0
        %v967 = vadd.f32 %v902, %v966
        %968 = vmatmul.f32.gmra.mxu0 %v315
        %v969 = vpop.f32.mrf.mxu0
        %v970 = vadd.f32 %v905, %v969
        %971 = vmatmul.f32.gmra.mxu0 %v316
        %v972 = vpop.f32.mrf.mxu0
        %v973 = vadd.f32 %v908, %v972
        %974 = vmatmul.f32.gmra.mxu0 %v317
        %v975 = vpop.f32.mrf.mxu0
        %v976 = vadd.f32 %v911, %v975
        %977 = vmatmul.f32.gmra.mxu0 %v318
        %v978 = vpop.f32.mrf.mxu0
        %v979 = vadd.f32 %v914, %v978
        %980 = vmatmul.f32.gmra.mxu0 %v319
        %v981 = vpop.f32.mrf.mxu0
        %v982 = vadd.f32 %v917, %v981
        %983 = vmatmul.f32.gmra.mxu0 %v320
        %v984 = vpop.f32.mrf.mxu0
        %v985 = vadd.f32 %v920, %v984
        %986 = vmatmul.f32.gmra.mxu0 %v321
        %v987 = vpop.f32.mrf.mxu0
        %v988 = vadd.f32 %v923, %v987
        %989 = vmatmul.f32.gmra.mxu0 %v322
        %v990 = vpop.f32.mrf.mxu0
        %v991 = vadd.f32 %v926, %v990
        %992 = vmatmul.f32.gmra.mxu0 %v323
        %v993 = vpop.f32.mrf.mxu0
        %v994 = vadd.f32 %v929, %v993
        %995 = vmatmul.f32.gmra.mxu0 %v324
        %v996 = vpop.f32.mrf.mxu0
        %v997 = vadd.f32 %v932, %v996
        %998 = vmatmul.f32.gmra.mxu0 %v325
        %v999 = vpop.f32.mrf.mxu0
        %v1000 = vadd.f32 %v935, %v999
        %1001 = vmatmul.f32.gmra.mxu0 %v326
        %v1002 = vpop.f32.mrf.mxu0
        %v1003 = vadd.f32 %v938, %v1002
        %1004 = vmatmul.f32.gmra.mxu0 %v327
        %v1005 = vpop.f32.mrf.mxu0
        %v1006 = vadd.f32 %v941, %v1005
        %1007 = vdwg.mxu0
        %1008 = vmatpush.msra.mxu0 %v487
        %1009 = vmatpush.msra.mxu0 %v486
        %1010 = vmatpush.msra.mxu0 %v485
        %1011 = vmatpush.msra.mxu0 %v484
        %1012 = vmatpush.msra.mxu0 %v483
        %1013 = vmatpush.msra.mxu0 %v482
        %1014 = vmatpush.msra.mxu0 %v481
        %1015 = vmatpush.msra.mxu0 %v480
        %1016 = vmatpush.msra.mxu0 %v479
        %1017 = vmatpush.msra.mxu0 %v478
        %1018 = vmatpush.msra.mxu0 %v477
        %1019 = vmatpush.msra.mxu0 %v476
        %1020 = vmatpush.msra.mxu0 %v475
        %1021 = vmatpush.msra.mxu0 %v474
        %1022 = vmatpush.msra.mxu0 %v473
        %1023 = vmatpush.msra.mxu0 %v472
        %1024 = vmatmul.f32.gmra.mxu0 %v328
        %v1025 = vpop.f32.mrf.mxu0
        %v1026 = vadd.f32 %v961, %v1025
        %1027 = vmatmul.f32.gmra.mxu0 %v329
        %v1028 = vpop.f32.mrf.mxu0
        %v1029 = vadd.f32 %v964, %v1028
        %1030 = vmatmul.f32.gmra.mxu0 %v330
        %v1031 = vpop.f32.mrf.mxu0
        %v1032 = vadd.f32 %v967, %v1031
        %1033 = vmatmul.f32.gmra.mxu0 %v331
        %v1034 = vpop.f32.mrf.mxu0
        %v1035 = vadd.f32 %v970, %v1034
        %1036 = vmatmul.f32.gmra.mxu0 %v332
        %v1037 = vpop.f32.mrf.mxu0
        %v1038 = vadd.f32 %v973, %v1037
        %1039 = vmatmul.f32.gmra.mxu0 %v333
        %v1040 = vpop.f32.mrf.mxu0
        %v1041 = vadd.f32 %v976, %v1040
        %1042 = vmatmul.f32.gmra.mxu0 %v334
        %v1043 = vpop.f32.mrf.mxu0
        %v1044 = vadd.f32 %v979, %v1043
        %1045 = vmatmul.f32.gmra.mxu0 %v335
        %v1046 = vpop.f32.mrf.mxu0
        %v1047 = vadd.f32 %v982, %v1046
        %1048 = vmatmul.f32.gmra.mxu0 %v336
        %v1049 = vpop.f32.mrf.mxu0
        %v1050 = vadd.f32 %v985, %v1049
        %1051 = vmatmul.f32.gmra.mxu0 %v337
        %v1052 = vpop.f32.mrf.mxu0
        %v1053 = vadd.f32 %v988, %v1052
        %1054 = vmatmul.f32.gmra.mxu0 %v338
        %v1055 = vpop.f32.mrf.mxu0
        %v1056 = vadd.f32 %v991, %v1055
        %1057 = vmatmul.f32.gmra.mxu0 %v339
        %v1058 = vpop.f32.mrf.mxu0
        %v1059 = vadd.f32 %v994, %v1058
        %1060 = vmatmul.f32.gmra.mxu0 %v340
        %v1061 = vpop.f32.mrf.mxu0
        %v1062 = vadd.f32 %v997, %v1061
        %1063 = vmatmul.f32.gmra.mxu0 %v341
        %v1064 = vpop.f32.mrf.mxu0
        %v1065 = vadd.f32 %v1000, %v1064
        %1066 = vmatmul.f32.gmra.mxu0 %v342
        %v1067 = vpop.f32.mrf.mxu0
        %v1068 = vadd.f32 %v1003, %v1067
        %1069 = vmatmul.f32.gmra.mxu0 %v343
        %v1070 = vpop.f32.mrf.mxu0
        %v1071 = vadd.f32 %v1006, %v1070
        %1072 = vdwg.mxu0
        %v1073 = vmul.f32 %v1026, 0.029462783
        %v1074 = vmul.f32 %v1029, 0.029462783
        %v1075 = vmul.f32 %v1032, 0.029462783
        %v1076 = vmul.f32 %v1035, 0.029462783
        %v1077 = vmul.f32 %v1038, 0.029462783
        %v1078 = vmul.f32 %v1041, 0.029462783
        %v1079 = vmul.f32 %v1044, 0.029462783
        %v1080 = vmul.f32 %v1047, 0.029462783
        %v1081 = vmul.f32 %v1050, 0.029462783
        %v1082 = vmul.f32 %v1053, 0.029462783
        %v1083 = vmul.f32 %v1056, 0.029462783
        %v1084 = vmul.f32 %v1059, 0.029462783
        %v1085 = vmul.f32 %v1062, 0.029462783
        %v1086 = vmul.f32 %v1065, 0.029462783
        %v1087 = vmul.f32 %v1068, 0.029462783
        %v1088 = vmul.f32 %v1071, 0.029462783
        %v1089 = vld [vmem:[%s2] sm:$0x1]
        %v1091 = vperm.slane %v1089, 0
        %v1093 = vadd.f32 %v1073, %v1091
        %v1094 = vadd.f32 %v1074, %v1091
        %v1095 = vadd.f32 %v1075, %v1091
        %v1096 = vadd.f32 %v1076, %v1091
        %v1097 = vadd.f32 %v1077, %v1091
        %v1098 = vadd.f32 %v1078, %v1091
        %v1099 = vadd.f32 %v1079, %v1091
        %v1100 = vadd.f32 %v1080, %v1091
        %v1101 = vadd.f32 %v1081, %v1091
        %v1102 = vadd.f32 %v1082, %v1091
        %v1103 = vadd.f32 %v1083, %v1091
        %v1104 = vadd.f32 %v1084, %v1091
        %v1105 = vadd.f32 %v1085, %v1091
        %v1106 = vadd.f32 %v1086, %v1091
        %v1107 = vadd.f32 %v1087, %v1091
        %v1108 = vadd.f32 %v1088, %v1091
        %1109 = vst [vmem:[%s187] sm:$0xff] %v1093
        %1110 = vst [vmem:[%s187 + $0x8] sm:$0xff] %v1094
        %1111 = vst [vmem:[%s187 + $0x10] sm:$0xff] %v1095
        %1112 = vst [vmem:[%s187 + $0x18] sm:$0xff] %v1096
        %1113 = vst [vmem:[%s187 + $0x20] sm:$0xff] %v1097
        %1114 = vst [vmem:[%s187 + $0x28] sm:$0xff] %v1098
        %1115 = vst [vmem:[%s187 + $0x30] sm:$0xff] %v1099
        %1116 = vst [vmem:[%s187 + $0x38] sm:$0xff] %v1100
        %1117 = vst [vmem:[%s187 + $0x40] sm:$0xff] %v1101
        %1118 = vst [vmem:[%s187 + $0x48] sm:$0xff] %v1102
        %1119 = vst [vmem:[%s187 + $0x50] sm:$0xff] %v1103
        %1120 = vst [vmem:[%s187 + $0x58] sm:$0xff] %v1104
        %1121 = vst [vmem:[%s187 + $0x60] sm:$0xff] %v1105
        %1122 = vst [vmem:[%s187 + $0x68] sm:$0xff] %v1106
        %1123 = vst [vmem:[%s187 + $0x70] sm:$0xff] %v1107
        %1124 = vst [vmem:[%s187 + $0x78] sm:$0xff] %v1108
        %s1125 = sand.u32 %s109, 1
        %s1126 = scalar_lea.sflag [#allocation3], %s1125
        %s1127 = sand.u32 %s109, 1
        %s1128 = smul.addr %s1127, 128
        %s1129 = scalar_lea.vmem [#allocation2], %s1128
        // Predicated region
        $region33: #{tpu_custom_call.1} parent=31 // pred_check
          %p1130 = pneg %p119
        $region34: #{tpu_custom_call.1} parent=31 // pred_check_branch
          %1132 = sbr.rel (%p1130) target = $region36
        $region35: #{tpu_custom_call.1} parent=31 // pred_region
          %s1133 = smul.u32 8, %s22
          %1135 = vsyncadd %s1126, 0
          %s1136 = smul.addr %s1133, 2
          %s1137 = smul.addr %s21, 32
          %s1138 = sadd.s32 %s1136, %s1137
          %s1139 = smul.addr %s1138, 8
          %s1140 = scalar_lea.hbm %s3, %s1139
          %s1141 = sshll.u32 %s1129, 4
          %s1142 = int_to_ptr.vmem [resolvable:$true] %s1141
          %s1143 = sshll.u32 %s1140, 4
          %s1144 = int_to_ptr.hbm [resolvable:$true] %s1143
          %1149 = dma.vmem_to_hbm [thread:$0]  %s1142, 2048, %s1144, %s1126, 128, 128, 8
        $region36: #{tpu_custom_call.1} parent=31 // pred_fallthru
          _
      $region32: #{tpu_custom_call.1} parent=5 // pred_fallthru
        _
      %p1150 = scmp.le.s32.totalorder 2, %s12
      // Predicated region
      $region37: #{tpu_custom_call.1} parent=5 // pred_check
        %p1151 = pneg %p1150
      $region38: #{tpu_custom_call.1} parent=5 // pred_check_branch
        %1153 = sbr.rel (%p1151) target = $region40
      $region39: #{tpu_custom_call.1} parent=5 // pred_region
        %s1154 = ssub.s32 %s12, 2
        // Predicated region
        $region41: #{tpu_custom_call.1} parent=39 // pred_check
          %p1155 = pneg %p125
        $region42: #{tpu_custom_call.1} parent=39 // pred_check_branch
          %1157 = sbr.rel (%p1155) target = $region44
        $region43: #{tpu_custom_call.1} parent=39 // pred_region
          %s1158 = sand.u32 %s110, 1
          %s1159 = scalar_lea.sflag [#allocation3], %s1158
          %s1160 = sand.u32 %s110, 1
          %s1161 = smul.addr %s1160, 128
          %s1162 = scalar_lea.vmem [#allocation2], %s1161
          %1164 = dma.done %s1159, 2048
        $region44: #{tpu_custom_call.1} parent=39 // pred_fallthru
          _
      $region40: #{tpu_custom_call.1} parent=5 // pred_fallthru
        _
    $region6: #{tpu_custom_call.1} parent=1 // loop_footer
      %s16 = sadd.s32 1, %s12
    $region7: #{tpu_custom_call.1} parent=1 // loop_footer_branch
      %11 = sbr.rel target = $region3
    $region8: #{tpu_custom_call.1} parent=1 // loop_exit
      _
    %1165 = vsyncpa [#allocation3], 1
    %s1166 = scalar_lea.sflag [#allocation3], 1
    %1167 = vsyncpa %s1166, 1

</llo_original>
